<compile_context>
chip_gen: v5e
topology: v5e:2x2
jax: 0.10.0
libtpu: 0.0.40
codegen_flags: <defaults>
</compile_context>

<pallas_src>
import functools
import math

import numpy as np
import jax
import jax.numpy as jnp
from jax.experimental import pallas as pl
from jax.experimental.pallas import tpu as pltpu


def cover_embed_kernel(xcat_ref, wconv_ref, bconv_ref, wlin_ref, blin_ref, out_ref,
                       *, c_half, c_half_pad, eps):
    # xcat_ref : (TILE_L, K*C_in)      (batch dim squeezed)
    # wconv_ref: (K*C_in, C_half_pad)  bconv_ref: (1, C_half_pad)
    # wlin_ref : (C_half_pad, E_pad)   blin_ref : (1, E_pad)
    # out_ref  : (TILE_L, E_pad)
    inv_sqrt2 = jnp.float32(1.0 / math.sqrt(2.0))
    inv_c = jnp.float32(1.0 / c_half)

    # Conv1d ('same', stride 1) as a single matmul: im2col was done in the wrapper.
    h = jnp.dot(xcat_ref[...], wconv_ref[...], preferred_element_type=jnp.float32)
    h = h + bconv_ref[...].astype(jnp.float32)            # (TILE_L, C_half_pad)
    # Padded channel columns are exactly 0 here (zero weights + zero bias).

    # Exact GELU (PyTorch nn.GELU default, erf form).
    h = 0.5 * h * (1.0 + jax.lax.erf(h * inv_sqrt2))       # GELU(0)=0 in padded cols

    # LayerNorm over the true C_half channels, no affine, eps=1e-6.
    mean = jnp.sum(h, axis=-1, keepdims=True) * inv_c      # padded cols contribute 0
    d = h - mean
    ssq = jnp.sum(d * d, axis=-1, keepdims=True)
    if c_half_pad != c_half:
        # Each zero-padded column contributed exactly (0 - mean)^2 = mean^2; remove it.
        ssq = ssq - jnp.float32(c_half_pad - c_half) * (mean * mean)
    hn = d * jax.lax.rsqrt(ssq * inv_c + jnp.float32(eps))
    # Padded columns of hn are nonzero, but the matching rows of wlin are zero.

    # Linear: (TILE_L, C_half_pad) @ (C_half_pad, E_pad) + bias
    out = jnp.dot(hn.astype(wlin_ref.dtype), wlin_ref[...],
                  preferred_element_type=jnp.float32)
    out = out + blin_ref[...].astype(jnp.float32)
    out_ref[...] = out.astype(out_ref.dtype)


def cover_embed(x, w_conv, b_conv, w_lin, b_lin, *, patch_size=2,
                tile_l=256, compute_dtype=jnp.float32, out_dtype=None):
    """x: (B, L, C_in).
       w_conv: (C_half, C_in, K)  [PyTorch Conv1d layout], b_conv: (C_half,)
       w_lin : (E, C_half)        [PyTorch Linear layout], b_lin: (E,)
       compute_dtype: jnp.bfloat16 recommended on v6e/v7x (MXU operands); f32 default."""
    B, L, C_in = x.shape
    K = 2 * patch_size - 1
    C_half = w_conv.shape[0]
    E = w_lin.shape[0]
    assert w_conv.shape == (C_half, C_in, K)
    pad = (K - 1) // 2
    out_dtype = x.dtype if out_dtype is None else out_dtype

    def _rup(n, m):
        return ((n + m - 1) // m) * m

    C_half_pad = _rup(C_half, 128)
    E_pad = _rup(E, 128)
    KC = K * C_in

    # ---- glue (plain JAX): im2col + parameter re-layout + lane padding ----
    # x traffic is tiny (C_in is 1-4), so the K-wide im2col copy is negligible vs the
    # (B, L, E) output; it removes the halo from the BlockSpec and fuses the K conv
    # taps into a single MXU matmul per tile.
    xpad = jnp.pad(x, ((0, 0), (pad, pad), (0, 0)))
    xcat = jnp.concatenate([xpad[:, k:k + L, :] for k in range(K)], axis=-1)  # (B,L,K*C_in)
    xcat = xcat.astype(compute_dtype)

    wconv = jnp.transpose(w_conv, (2, 1, 0)).reshape(KC, C_half)       # row = k*C_in + c
    wconv = jnp.pad(wconv, ((0, 0), (0, C_half_pad - C_half))).astype(compute_dtype)
    bconv = jnp.pad(b_conv, (0, C_half_pad - C_half)).reshape(1, C_half_pad).astype(jnp.float32)
    wlin = jnp.transpose(w_lin, (1, 0))                                # (C_half, E)
    wlin = jnp.pad(wlin, ((0, C_half_pad - C_half), (0, E_pad - E))).astype(compute_dtype)
    blin = jnp.pad(b_lin, (0, E_pad - E)).reshape(1, E_pad).astype(jnp.float32)

    # ---- tiling ----
    tl = L if L <= tile_l else tile_l          # tile_l must be a multiple of 8
    grid = (B, pl.cdiv(L, tl))

    # Explicit VMEM budget (double-buffered x/out tiles + resident weights + f32 temps),
    # capped below v7x's 64 MiB physical VMEM.
    isz = jnp.dtype(compute_dtype).itemsize
    osz = jnp.dtype(out_dtype).itemsize
    est = (2 * tl * KC * isz + 2 * tl * E_pad * osz
           + (KC * C_half_pad + C_half_pad * E_pad) * isz + (C_half_pad + E_pad) * 4
           + 6 * tl * C_half_pad * 4 + 3 * tl * E_pad * 4)
    vmem_limit = int(min(max(2 * est, 32 * 1024 * 1024), 60 * 1024 * 1024))

    kernel = functools.partial(cover_embed_kernel,
                               c_half=C_half, c_half_pad=C_half_pad, eps=1e-6)

    out = pl.pallas_call(
        kernel,
        out_shape=jax.ShapeDtypeStruct((B, L, E_pad), out_dtype),
        grid_spec=pltpu.PrefetchScalarGridSpec(
            num_scalar_prefetch=0,
            grid=grid,
            in_specs=[
                pl.BlockSpec((pl.Squeezed(), tl, KC), lambda b, l: (b, l, 0)),
                pl.BlockSpec((KC, C_half_pad), lambda b, l: (0, 0)),       # resident
                pl.BlockSpec((1, C_half_pad), lambda b, l: (0, 0)),        # resident
                pl.BlockSpec((C_half_pad, E_pad), lambda b, l: (0, 0)),    # resident
                pl.BlockSpec((1, E_pad), lambda b, l: (0, 0)),             # resident
            ],
            out_specs=pl.BlockSpec((pl.Squeezed(), tl, E_pad), lambda b, l: (b, l, 0)),
        ),
        compiler_params=pltpu.CompilerParams(
            dimension_semantics=("parallel", "parallel"),
            vmem_limit_bytes=vmem_limit,
        ),
    )(xcat, wconv, bconv, wlin, blin)

    return out if E_pad == E else out[:, :, :E]


def cover_embed_ref(x, w_conv, b_conv, w_lin, b_lin, *, patch_size=2):
    """Independent pure-JAX reference mirroring the PyTorch forward
    (real conv op, not the kernel's shifted-matmul/im2col formulation)."""
    K = 2 * patch_size - 1
    pad = (K - 1) // 2
    x_ncl = jnp.transpose(x, (0, 2, 1))                              # (B, C_in, L)
    conv = jax.lax.conv_general_dilated(
        x_ncl, w_conv, window_strides=(1,), padding=[(pad, pad)],
        dimension_numbers=("NCH", "OIH", "NCH"))
    conv = conv + b_conv[None, :, None]
    h = jnp.transpose(conv, (0, 2, 1))                               # (B, L, C_half)
    h = 0.5 * h * (1.0 + jax.lax.erf(h / jnp.sqrt(jnp.float32(2.0))))  # exact GELU
    mean = jnp.mean(h, axis=-1, keepdims=True)
    var = jnp.mean((h - mean) ** 2, axis=-1, keepdims=True)
    hn = (h - mean) * jax.lax.rsqrt(var + 1e-6)
    return jnp.einsum("blc,ec->ble", hn, w_lin) + b_lin[None, None, :]


if __name__ == "__main__":
    # Small, module-consistent shapes.
    B, L = 2, 16
    patch_size = 2            # -> kernel_size = 3
    in_chans = 4
    embed_dim = 64
    C_half = embed_dim // 2
    K = 2 * patch_size - 1

    key = jax.random.PRNGKey(0)
    kx, kw1, kb1, kw2, kb2 = jax.random.split(key, 5)

    x = jax.random.normal(kx, (B, L, in_chans), dtype=jnp.float32)

    # Deterministic synthetic parameters (PyTorch-style uniform fan-in init).
    conv_bound = 1.0 / math.sqrt(in_chans * K)
    w_conv = jax.random.uniform(kw1, (C_half, in_chans, K), jnp.float32,
                                -conv_bound, conv_bound)
    b_conv = jax.random.uniform(kb1, (C_half,), jnp.float32, -conv_bound, conv_bound)
    lin_bound = 1.0 / math.sqrt(C_half)
    w_lin = jax.random.uniform(kw2, (embed_dim, C_half), jnp.float32,
                               -lin_bound, lin_bound)
    b_lin = jax.random.uniform(kb2, (embed_dim,), jnp.float32, -lin_bound, lin_bound)

    out = cover_embed(x, w_conv, b_conv, w_lin, b_lin, patch_size=patch_size)
    out = jax.block_until_ready(out)

    ref = cover_embed_ref(x, w_conv, b_conv, w_lin, b_lin, patch_size=patch_size)
    np.testing.assert_allclose(np.asarray(out), np.asarray(ref), atol=1e-5, rtol=1e-5)

    print("KERNEL_OK")
</pallas_src>

<mosaic_0001>
module attributes {stable_mosaic.version = 11 : i64} {
  func.func @cover_embed_kernel(%arg0: i32, %arg1: i32, %arg2: memref<1x16x12xf32, #tpu.memory_space<vmem>>, %arg3: memref<12x128xf32, #tpu.memory_space<vmem>>, %arg4: memref<1x128xf32, #tpu.memory_space<vmem>>, %arg5: memref<128x128xf32, #tpu.memory_space<vmem>>, %arg6: memref<1x128xf32, #tpu.memory_space<vmem>>, %arg7: memref<1x16x128xf32, #tpu.memory_space<vmem>>) attributes {dimension_semantics = [#tpu.dimension_semantics<parallel>, #tpu.dimension_semantics<parallel>], iteration_bounds = array<i64: 2, 1>, scalar_prefetch = 0 : i64, scratch_operands = 0 : i64, tpu.core_type = #tpu.core_type<tc>, window_params = [{transform_indices = @transform_0, window_bounds = array<i64: 1, 16, 12>}, {pipeline_mode = #tpu.pipeline_mode<synchronous>, transform_indices = @transform_1, window_bounds = array<i64: 12, 128>}, {pipeline_mode = #tpu.pipeline_mode<synchronous>, transform_indices = @transform_2, window_bounds = array<i64: 1, 128>}, {pipeline_mode = #tpu.pipeline_mode<synchronous>, transform_indices = @transform_3, window_bounds = array<i64: 128, 128>}, {pipeline_mode = #tpu.pipeline_mode<synchronous>, transform_indices = @transform_4, window_bounds = array<i64: 1, 128>}, {transform_indices = @transform_5, window_bounds = array<i64: 1, 16, 128>}]} {
    %c0 = arith.constant 0 : index
    %c0_0 = arith.constant 0 : index
    %c0_1 = arith.constant 0 : index
    %0 = vector.load %arg2[%c0, %c0_0, %c0_1] : memref<1x16x12xf32, #tpu.memory_space<vmem>>, vector<1x16x12xf32>
    %1 = vector.shape_cast %0 : vector<1x16x12xf32> to vector<16x12xf32>
    %c0_2 = arith.constant 0 : index
    %c0_3 = arith.constant 0 : index
    %2 = vector.load %arg3[%c0_2, %c0_3] : memref<12x128xf32, #tpu.memory_space<vmem>>, vector<12x128xf32>
    %cst = arith.constant dense<0.000000e+00> : vector<16x128xf32>
    %3 = tpu.matmul %1, %2, %cst {dimension_numbers = #tpu.dot_dimension_numbers<[1], [0], [0], [1], [0, 0, 1, 1], [], []>} : vector<16x12xf32>, vector<12x128xf32>, vector<16x128xf32> -> vector<16x128xf32>
    %c0_4 = arith.constant 0 : index
    %c0_5 = arith.constant 0 : index
    %4 = vector.load %arg4[%c0_4, %c0_5] : memref<1x128xf32, #tpu.memory_space<vmem>>, vector<1x128xf32>
    %5 = vector.broadcast %4 : vector<1x128xf32> to vector<16x128xf32>
    %6 = arith.addf %3, %5 : vector<16x128xf32>
    %cst_6 = arith.constant 5.000000e-01 : f32
    %7 = vector.broadcast %cst_6 : f32 to vector<16x128xf32>
    %8 = arith.mulf %7, %6 : vector<16x128xf32>
    %cst_7 = arith.constant 0.707106769 : f32
    %9 = vector.broadcast %cst_7 : f32 to vector<16x128xf32>
    %10 = arith.mulf %6, %9 : vector<16x128xf32>
    %11 = math.erf %10 : vector<16x128xf32>
    %cst_8 = arith.constant 1.000000e+00 : f32
    %12 = vector.broadcast %cst_8 : f32 to vector<16x128xf32>
    %13 = arith.addf %12, %11 : vector<16x128xf32>
    %14 = arith.mulf %8, %13 : vector<16x128xf32>
    %cst_9 = arith.constant dense<0.000000e+00> : vector<16xf32>
    %15 = vector.multi_reduction <add>, %14, %cst_9 [1] : vector<16x128xf32> to vector<16xf32>
    %16 = vector.shape_cast %15 : vector<16xf32> to vector<16x1xf32>
    %cst_10 = arith.constant 3.125000e-02 : f32
    %17 = vector.broadcast %cst_10 : f32 to vector<16x1xf32>
    %18 = arith.mulf %16, %17 : vector<16x1xf32>
    %19 = vector.broadcast %18 : vector<16x1xf32> to vector<16x128xf32>
    %20 = arith.subf %14, %19 : vector<16x128xf32>
    %21 = arith.mulf %20, %20 : vector<16x128xf32>
    %cst_11 = arith.constant dense<0.000000e+00> : vector<16xf32>
    %22 = vector.multi_reduction <add>, %21, %cst_11 [1] : vector<16x128xf32> to vector<16xf32>
    %23 = vector.shape_cast %22 : vector<16xf32> to vector<16x1xf32>
    %24 = arith.mulf %18, %18 : vector<16x1xf32>
    %cst_12 = arith.constant 9.600000e+01 : f32
    %25 = vector.broadcast %cst_12 : f32 to vector<16x1xf32>
    %26 = arith.mulf %25, %24 : vector<16x1xf32>
    %27 = arith.subf %23, %26 : vector<16x1xf32>
    %cst_13 = arith.constant 3.125000e-02 : f32
    %28 = vector.broadcast %cst_13 : f32 to vector<16x1xf32>
    %29 = arith.mulf %27, %28 : vector<16x1xf32>
    %cst_14 = arith.constant 9.99999997E-7 : f32
    %30 = vector.broadcast %cst_14 : f32 to vector<16x1xf32>
    %31 = arith.addf %29, %30 : vector<16x1xf32>
    %32 = math.rsqrt %31 : vector<16x1xf32>
    %33 = vector.broadcast %32 : vector<16x1xf32> to vector<16x128xf32>
    %34 = arith.mulf %20, %33 : vector<16x128xf32>
    %c0_15 = arith.constant 0 : index
    %c0_16 = arith.constant 0 : index
    %35 = vector.load %arg5[%c0_15, %c0_16] : memref<128x128xf32, #tpu.memory_space<vmem>>, vector<128x128xf32>
    %cst_17 = arith.constant dense<0.000000e+00> : vector<16x128xf32>
    %36 = tpu.matmul %34, %35, %cst_17 {dimension_numbers = #tpu.dot_dimension_numbers<[1], [0], [0], [1], [0, 0, 1, 1], [], []>} : vector<16x128xf32>, vector<128x128xf32>, vector<16x128xf32> -> vector<16x128xf32>
    %c0_18 = arith.constant 0 : index
    %c0_19 = arith.constant 0 : index
    %37 = vector.load %arg6[%c0_18, %c0_19] : memref<1x128xf32, #tpu.memory_space<vmem>>, vector<1x128xf32>
    %38 = vector.broadcast %37 : vector<1x128xf32> to vector<16x128xf32>
    %39 = arith.addf %36, %38 : vector<16x128xf32>
    %c0_20 = arith.constant 0 : index
    %c0_21 = arith.constant 0 : index
    %c0_22 = arith.constant 0 : index
    %40 = vector.load %arg7[%c0_20, %c0_21, %c0_22] : memref<1x16x128xf32, #tpu.memory_space<vmem>>, vector<1x16x128xf32>
    %41 = vector.shape_cast %40 : vector<1x16x128xf32> to vector<16x128xf32>
    %42 = vector.shape_cast %39 : vector<16x128xf32> to vector<1x16x128xf32>
    tpu.vector_store %arg7[%c0_20, %c0_21, %c0_22], %42 {strides = array<i32>} : memref<1x16x128xf32, #tpu.memory_space<vmem>>, vector<1x16x128xf32>,
    return
  }
  func.func @transform_0(%arg0: i32, %arg1: i32) -> (i32, i32, i32) {
    %c0_i32 = arith.constant 0 : i32
    %c0_i32_0 = arith.constant 0 : i32
    return %arg0, %arg1, %c0_i32 : i32, i32, i32
  }
  func.func @transform_1(%arg0: i32, %arg1: i32) -> (i32, i32) {
    %c0_i32 = arith.constant 0 : i32
    %c0_i32_0 = arith.constant 0 : i32
    %c0_i32_1 = arith.constant 0 : i32
    return %c0_i32, %c0_i32_0 : i32, i32
  }
  func.func @transform_2(%arg0: i32, %arg1: i32) -> (i32, i32) {
    %c0_i32 = arith.constant 0 : i32
    %c0_i32_0 = arith.constant 0 : i32
    %c0_i32_1 = arith.constant 0 : i32
    return %c0_i32, %c0_i32_0 : i32, i32
  }
  func.func @transform_3(%arg0: i32, %arg1: i32) -> (i32, i32) {
    %c0_i32 = arith.constant 0 : i32
    %c0_i32_0 = arith.constant 0 : i32
    %c0_i32_1 = arith.constant 0 : i32
    return %c0_i32, %c0_i32_0 : i32, i32
  }
  func.func @transform_4(%arg0: i32, %arg1: i32) -> (i32, i32) {
    %c0_i32 = arith.constant 0 : i32
    %c0_i32_0 = arith.constant 0 : i32
    %c0_i32_1 = arith.constant 0 : i32
    return %c0_i32, %c0_i32_0 : i32, i32
  }
  func.func @transform_5(%arg0: i32, %arg1: i32) -> (i32, i32, i32) {
    %c0_i32 = arith.constant 0 : i32
    %c0_i32_0 = arith.constant 0 : i32
    return %arg0, %arg1, %c0_i32 : i32, i32, i32
  }
}

</mosaic_0001>

<llo_original>
// kernel: tpu_custom_call.1
$region0: #{tpu_custom_call.1}
  #allocation0 [shape = 'u32[]', space=smem, size = 0x4, offset = 0x4, fixed_abs, tag = 'smem constant byte address 0x4 - core index']
  #allocation1 [shape = 'u32[72,128]{1,0:T(1,128)}', space=vmem, size = 0x9000, scoped, tag = 'internal scratch']
  %s0 = inlined_call_operand.vmem [shape: f32[2,16,12], index: 0, kind: input, shape index: {}]
  %s1 = inlined_call_operand.vmem [shape: f32[12,128], index: 1, kind: input, shape index: {}]
  %s2 = inlined_call_operand.vmem [shape: f32[1,128], index: 2, kind: input, shape index: {}]
  %s3 = inlined_call_operand.hbm [shape: f32[128,128], index: 3, kind: input, shape index: {}]
  %s4 = inlined_call_operand.vmem [shape: f32[1,128], index: 4, kind: input, shape index: {}]
  %s5 = inlined_call_operand.hbm [shape: f32[2,16,128], index: 5, kind: output, shape index: {}]
  %s6 = sld [smem:[#allocation0]]
  $region57: #{tpu_custom_call.1} parent=0
    _
  %s8 = ssub.s32 1, %s6
  %s9 = scalar_select 0, %s8, %s6
  $region1: #{tpu_custom_call.1} parent=0
    #allocation2 [shape = 'u8[65536]{0}', space=vmem, size = 0x10000, scoped, tag = 'input window, operand 3, single buffered']
    #allocation3 [shape = 's32[2]{0}', space=sflag, size = 0x8, scoped, tag = 'scoped memory for tpu_custom_call.1']
    #allocation4 [shape = 's32[2]{0}', space=sflag, size = 0x8, scoped, tag = 'scoped memory for tpu_custom_call.1']
    #allocation5 [shape = 'u8[16384]{0}', space=vmem, size = 0x4000, scoped, tag = 'output window, operand 0']
    %10 = vsyncpa [#allocation3], 0
    %11 = vsyncpa [#allocation4], 0
    %s12 = scalar_lea.sflag [#allocation4], 1
    %13 = vsyncpa %s12, 0
    loop: start=0, step=1, limit=4
    $region2: #{tpu_custom_call.1} parent=1 // loop_pre_header
      _
    $region3: #{tpu_custom_call.1} parent=1 // loop_header
      %s15 = sphi 0, %s19
      %p16 = scmp.ge.s32.totalorder %s15, 4
      %s22 = sphi 0, %s34
      %s23 = sphi 0, %s30
      %s24 = sphi 0, %s22
      %s25 = sphi 0, %s23
      %s26 = sphi 0, %s24
      %s27 = sphi 0, %s25
      %s39 = sphi 0, %s41
      %s42 = sphi 0, %s39
      %s43 = sphi 0, %s42
      %s59 = sphi 0, %s43
      %s63 = sphi 0, %s63
      %s65 = sphi 0, %s63
      %s66 = sphi 0, %s65
      %s80 = sphi 0, %s66
      %s84 = sphi 0, %s84
      %s86 = sphi 0, %s84
      %s87 = sphi 0, %s86
      %s101 = sphi 0, %s87
      %s105 = sphi 0, %s105
      %s107 = sphi 0, %s105
      %s108 = sphi 0, %s107
      %s122 = sphi 0, %s108
      %s126 = sphi 0, %s126
      %s128 = sphi 0, %s126
      %s129 = sphi 0, %s128
      %s143 = sphi 0, %s129
      %s151 = sphi 0, %s153
      %s154 = sphi 0, %s151
      %s155 = sphi 0, %s154
      %s171 = sphi 0, %s155
    $region4: #{tpu_custom_call.1} parent=1 // loop_header_branch
      %18 = sbr.rel (%p16) target = $region8
    $region5: #{tpu_custom_call.1} parent=1 // loop_body
      %s20 = ssub.s32 %s15, 1
      %s21 = ssub.s32 %s15, 2
      %s28 = sadd.s32 1, %s23
      %p29 = scmp.ge.s32.totalorder %s28, 1
      %s30 = scalar_select %p29, 0, %s28
      %s31 = sadd.s32 1, %s22
      %s32 = scalar_select %p29, %s31, %s22
      %p33 = scmp.ge.s32.totalorder %s32, 2
      %s34 = scalar_select %p33, 0, %s32
      %s35 = ssub.s32 %s22, %s34
      %s36 = ssub.s32 %s23, %s30
      %s37 = sor.u32 %s35, %s36
      %p38 = scmp.eq.s32.totalorder %s37, 0
      %s40 = sadd.s32 %s39, 1
      %s41 = scalar_select %p38, %s39, %s40
      %p44 = pneg %p38
      %p45 = scmp.eq.s32.totalorder %s15, 1
      %p46 = por %p44, %p45
      %p47 = scmp.ne.s32.totalorder %s39, %s42
      %p48 = scmp.eq.s32.totalorder %s15, 0
      %p49 = por %p47, %p48
      %p50 = scmp.ne.s32.totalorder %s39, %s42
      %p51 = scmp.eq.s32.totalorder %s20, 1
      %p52 = por %p50, %p51
      %p53 = scmp.ne.s32.totalorder %s42, %s43
      %p54 = scmp.eq.s32.totalorder %s20, 0
      %p55 = por %p53, %p54
      %p56 = scmp.ne.s32.totalorder %s42, %s43
      %p57 = scmp.eq.s32.totalorder %s21, 1
      %p58 = por %p56, %p57
      %p60 = scmp.ne.s32.totalorder %s43, %s59
      %p61 = scmp.eq.s32.totalorder %s21, 0
      %p62 = por %p60, %p61
      %s64 = sadd.s32 %s63, 1
      %p67 = scmp.eq.s32.totalorder %s15, 1
      %p68 = scmp.ne.s32.totalorder %s63, %s65
      %p69 = scmp.eq.s32.totalorder %s15, 0
      %p70 = por %p68, %p69
      %p71 = scmp.ne.s32.totalorder %s63, %s65
      %p72 = scmp.eq.s32.totalorder %s20, 1
      %p73 = por %p71, %p72
      %p74 = scmp.ne.s32.totalorder %s65, %s66
      %p75 = scmp.eq.s32.totalorder %s20, 0
      %p76 = por %p74, %p75
      %p77 = scmp.ne.s32.totalorder %s65, %s66
      %p78 = scmp.eq.s32.totalorder %s21, 1
      %p79 = por %p77, %p78
      %p81 = scmp.ne.s32.totalorder %s66, %s80
      %p82 = scmp.eq.s32.totalorder %s21, 0
      %p83 = por %p81, %p82
      %s85 = sadd.s32 %s84, 1
      %p88 = scmp.eq.s32.totalorder %s15, 1
      %p89 = scmp.ne.s32.totalorder %s84, %s86
      %p90 = scmp.eq.s32.totalorder %s15, 0
      %p91 = por %p89, %p90
      %p92 = scmp.ne.s32.totalorder %s84, %s86
      %p93 = scmp.eq.s32.totalorder %s20, 1
      %p94 = por %p92, %p93
      %p95 = scmp.ne.s32.totalorder %s86, %s87
      %p96 = scmp.eq.s32.totalorder %s20, 0
      %p97 = por %p95, %p96
      %p98 = scmp.ne.s32.totalorder %s86, %s87
      %p99 = scmp.eq.s32.totalorder %s21, 1
      %p100 = por %p98, %p99
      %p102 = scmp.ne.s32.totalorder %s87, %s101
      %p103 = scmp.eq.s32.totalorder %s21, 0
      %p104 = por %p102, %p103
      %s106 = sadd.s32 %s105, 1
      %p109 = scmp.eq.s32.totalorder %s15, 1
      %p110 = scmp.ne.s32.totalorder %s105, %s107
      %p111 = scmp.eq.s32.totalorder %s15, 0
      %p112 = por %p110, %p111
      %p113 = scmp.ne.s32.totalorder %s105, %s107
      %p114 = scmp.eq.s32.totalorder %s20, 1
      %p115 = por %p113, %p114
      %p116 = scmp.ne.s32.totalorder %s107, %s108
      %p117 = scmp.eq.s32.totalorder %s20, 0
      %p118 = por %p116, %p117
      %p119 = scmp.ne.s32.totalorder %s107, %s108
      %p120 = scmp.eq.s32.totalorder %s21, 1
      %p121 = por %p119, %p120
      %p123 = scmp.ne.s32.totalorder %s108, %s122
      %p124 = scmp.eq.s32.totalorder %s21, 0
      %p125 = por %p123, %p124
      %s127 = sadd.s32 %s126, 1
      %p130 = scmp.eq.s32.totalorder %s15, 1
      %p131 = scmp.ne.s32.totalorder %s126, %s128
      %p132 = scmp.eq.s32.totalorder %s15, 0
      %p133 = por %p131, %p132
      %p134 = scmp.ne.s32.totalorder %s126, %s128
      %p135 = scmp.eq.s32.totalorder %s20, 1
      %p136 = por %p134, %p135
      %p137 = scmp.ne.s32.totalorder %s128, %s129
      %p138 = scmp.eq.s32.totalorder %s20, 0
      %p139 = por %p137, %p138
      %p140 = scmp.ne.s32.totalorder %s128, %s129
      %p141 = scmp.eq.s32.totalorder %s21, 1
      %p142 = por %p140, %p141
      %p144 = scmp.ne.s32.totalorder %s129, %s143
      %p145 = scmp.eq.s32.totalorder %s21, 0
      %p146 = por %p144, %p145
      %s147 = ssub.s32 %s22, %s34
      %s148 = ssub.s32 %s23, %s30
      %s149 = sor.u32 %s147, %s148
      %p150 = scmp.eq.s32.totalorder %s149, 0
      %s152 = sadd.s32 %s151, 1
      %s153 = scalar_select %p150, %s151, %s152
      %p156 = pneg %p150
      %p157 = scmp.eq.s32.totalorder %s15, 1
      %p158 = por %p156, %p157
      %p159 = scmp.ne.s32.totalorder %s151, %s154
      %p160 = scmp.eq.s32.totalorder %s15, 0
      %p161 = por %p159, %p160
      %p162 = scmp.ne.s32.totalorder %s151, %s154
      %p163 = scmp.eq.s32.totalorder %s20, 1
      %p164 = por %p162, %p163
      %p165 = scmp.ne.s32.totalorder %s154, %s155
      %p166 = scmp.eq.s32.totalorder %s20, 0
      %p167 = por %p165, %p166
      %p168 = scmp.ne.s32.totalorder %s154, %s155
      %p169 = scmp.eq.s32.totalorder %s21, 1
      %p170 = por %p168, %p169
      %p172 = scmp.ne.s32.totalorder %s155, %s171
      %p173 = scmp.eq.s32.totalorder %s21, 0
      %p174 = por %p172, %p173
      %p175 = scmp.le.s32.totalorder 1, %s15
      %p176 = scmp.lt.s32.totalorder %s15, 3
      %p177 = pnand %p175, %p176
      %p178 = pneg %p177
      // Predicated region
      $region9: #{tpu_custom_call.1} parent=5 // pred_check
        _
      $region10: #{tpu_custom_call.1} parent=5 // pred_check_branch
        %180 = sbr.rel (%p177) target = $region12
      $region11: #{tpu_custom_call.1} parent=5 // pred_region
        %s181 = ssub.s32 %s15, 1
        // Predicated region
        $region13: #{tpu_custom_call.1} parent=11 // pred_check
          %p182 = pneg %p76
        $region14: #{tpu_custom_call.1} parent=11 // pred_check_branch
          %184 = sbr.rel (%p182) target = $region16
        $region15: #{tpu_custom_call.1} parent=11 // pred_region
          _
        $region16: #{tpu_custom_call.1} parent=11 // pred_fallthru
          _
        // Predicated region
        $region17: #{tpu_custom_call.1} parent=11 // pred_check
          %p185 = pneg %p97
        $region18: #{tpu_custom_call.1} parent=11 // pred_check_branch
          %187 = sbr.rel (%p185) target = $region20
        $region19: #{tpu_custom_call.1} parent=11 // pred_region
          _
        $region20: #{tpu_custom_call.1} parent=11 // pred_fallthru
          _
        // Predicated region
        $region21: #{tpu_custom_call.1} parent=11 // pred_check
          %p188 = pneg %p118
        $region22: #{tpu_custom_call.1} parent=11 // pred_check_branch
          %190 = sbr.rel (%p188) target = $region24
        $region23: #{tpu_custom_call.1} parent=11 // pred_region
          %192 = vsyncadd [#allocation3], 0
          %s193 = sshll.u32 %s3, 4
          %s194 = int_to_ptr.hbm [resolvable:$true] %s193
          %s195 = sshll.u32 [#allocation2], 4
          %s196 = int_to_ptr.vmem [resolvable:$true] %s195
          %201 = dma.hbm_to_vmem [thread:$0]  %s194, 2048, %s196, [#allocation3], 128, 128, 8
        $region24: #{tpu_custom_call.1} parent=11 // pred_fallthru
          _
        // Predicated region
        $region25: #{tpu_custom_call.1} parent=11 // pred_check
          %p202 = pneg %p139
        $region26: #{tpu_custom_call.1} parent=11 // pred_check_branch
          %204 = sbr.rel (%p202) target = $region28
        $region27: #{tpu_custom_call.1} parent=11 // pred_region
          _
        $region28: #{tpu_custom_call.1} parent=11 // pred_fallthru
          _
      $region12: #{tpu_custom_call.1} parent=5 // pred_fallthru
        _
      %p205 = scmp.lt.s32.totalorder %s15, 2
      // Predicated region
      $region29: #{tpu_custom_call.1} parent=5 // pred_check
        %p206 = pneg %p205
      $region30: #{tpu_custom_call.1} parent=5 // pred_check_branch
        %208 = sbr.rel (%p206) target = $region32
      $region31: #{tpu_custom_call.1} parent=5 // pred_region
        // Predicated region
        $region33: #{tpu_custom_call.1} parent=31 // pred_check
          %p209 = pneg %p49
        $region34: #{tpu_custom_call.1} parent=31 // pred_check_branch
          %211 = sbr.rel (%p209) target = $region36
        $region35: #{tpu_custom_call.1} parent=31 // pred_region
          %s212 = smul.u32 2, %s23
          %p213 = scmp.lt.s32.totalorder %s22, 1
          %s214 = scalar_select %p213, %s22, 1
          %p215 = scmp.lt.s32.totalorder %s212, 1
          %s216 = scalar_select %p215, %s212, 1
          %s217 = smul.addr %s214, 2
          %s218 = sadd.s32 %s216, %s217
          %s219 = smul.addr %s218, 8
          %s220 = scalar_lea.vmem %s0, %s219
          %s221 = smul.u32 2, %s23
        $region36: #{tpu_custom_call.1} parent=31 // pred_fallthru
          _
      $region32: #{tpu_custom_call.1} parent=5 // pred_fallthru
        _
      %p222 = scmp.le.s32.totalorder 1, %s15
      %p223 = scmp.lt.s32.totalorder %s15, 3
      %p224 = pnand %p222, %p223
      %p225 = pneg %p224
      // Predicated region
      $region37: #{tpu_custom_call.1} parent=5 // pred_check
        _
      $region38: #{tpu_custom_call.1} parent=5 // pred_check_branch
        %227 = sbr.rel (%p224) target = $region40
      $region39: #{tpu_custom_call.1} parent=5 // pred_region
        %s228 = ssub.s32 %s15, 1
        // Predicated region
        $region41: #{tpu_custom_call.1} parent=39 // pred_check
          %p229 = pneg %p118
        $region42: #{tpu_custom_call.1} parent=39 // pred_check_branch
          %231 = sbr.rel (%p229) target = $region44
        $region43: #{tpu_custom_call.1} parent=39 // pred_region
          %233 = dma.done [#allocation3], 2048
        $region44: #{tpu_custom_call.1} parent=39 // pred_fallthru
          _
        %s234 = smul.u32 2, %s25
        %p235 = scmp.lt.s32.totalorder %s24, 1
        %s236 = scalar_select %p235, %s24, 1
        %p237 = scmp.lt.s32.totalorder %s234, 1
        %s238 = scalar_select %p237, %s234, 1
        %s239 = smul.addr %s236, 2
        %s240 = sadd.s32 %s238, %s239
        %s241 = smul.addr %s240, 8
        %s242 = scalar_lea.vmem %s0, %s241
        %p243 = pneg %p55
        %p244 = pneg %p52
        %p245 = pneg %p76
        %p246 = pneg %p73
        %p247 = pneg %p97
        %p248 = pneg %p94
        %p249 = pneg %p118
        %p250 = pneg %p115
        %p251 = pneg %p139
        %p252 = pneg %p136
        %p253 = pneg %p167
        %p254 = pneg %p164
        %s255 = sand.u32 %s154, 1
        %s256 = scalar_lea.sflag [#allocation4], %s255
        %s257 = sand.u32 %s154, 1
        %s258 = smul.addr %s257, 16
        %s259 = scalar_lea.vmem [#allocation5], %s258
        %s260 = smul.u32 2, %s25
        %p261 = scmp.lt.s32.totalorder %s24, 1
        %s262 = scalar_select %p261, %s24, 1
        %p263 = scmp.lt.s32.totalorder %s260, 1
        %s264 = scalar_select %p263, %s260, 1
        %s265 = smul.addr %s262, 2
        %s266 = sadd.s32 %s264, %s265
        %s267 = smul.addr %s266, 8
        %s268 = scalar_lea.vmem %s0, %s267
        %s269 = smul.u32 2, %s25
        %s270 = smul.u32 2, %s25
        %v271 = vld [vmem:[%s268] sm:$0xff]
        %v272 = vld [vmem:[%s268 + $0x8] sm:$0xff]
        %v273 = vld [vmem:[%s1] sm:$0xff]
        %v274 = vld [vmem:[%s1 + $0x8] sm:$0xf]
        %v275 = vld [vmem:[%s2] sm:$0x1]
        %v277 = vperm.slane %v275, 0
        %vm279 = vcmask 97280
        %v281 = vsel %vm279, %v271, 0
        %v284 = vsel %vm279, %v272, 0
        %vm286 = vcmask 1043456
        %v288 = vsel %vm286, %v274, 0
        %290 = vmatpush.msra.mxu0 0.0
        %291 = vmatpush.msra.mxu0 0.0
        %292 = vmatpush.msra.mxu0 0.0
        %293 = vmatpush.msra.mxu0 0.0
        %294 = vmatpush.msra.mxu0 0.0
        %295 = vmatpush.msra.mxu0 0.0
        %296 = vmatpush.msra.mxu0 0.0
        %297 = vmatpush.msra.mxu0 0.0
        %298 = vmatpush.msra.mxu0 0.0
        %299 = vmatpush.msra.mxu0 0.0
        %300 = vmatpush.msra.mxu0 0.0
        %301 = vmatpush.msra.mxu0 0.0
        %302 = vmatpush.msra.mxu0 0.0
        %303 = vmatpush.msra.mxu0 0.0
        %304 = vmatpush.msra.mxu0 %v288
        %305 = vmatpush.msra.mxu0 %v273
        %306 = vmatmul.f32.gmra.mxu0 %v281
        %v307 = vpop.f32.mrf.mxu0
        %v308 = vadd.f32 %v277, %v307
        %309 = vmatmul.f32.gmra.mxu0 %v284
        %v310 = vpop.f32.mrf.mxu0
        %v311 = vadd.f32 %v277, %v310
        %312 = vdwg.mxu0
        %v313 = vmul.f32 %v308, 0.5
        %v314 = vmul.f32 %v311, 0.5
        %v315 = vmul.f32 %v308, 0.70710677
        %v316 = vmul.f32 %v311, 0.70710677
        %v317 = vmul.f32 %v315, %v315
        %v318 = vmin.f32 16.0, %v317
        %v319 = vmul.f32 %v318, 2.1237322e-06
        %v320 = vadd.f32 %v319, 0.00028619796
        %v321 = vmul.f32 %v318, %v320
        %v322 = vadd.f32 %v321, 0.0036580483
        %v323 = vmul.f32 %v318, %v322
        %v324 = vadd.f32 %v323, 0.05243302
        %v325 = vmul.f32 %v318, %v324
        %v326 = vadd.f32 %v325, 0.18741608
        %v327 = vmul.f32 %v318, %v326
        %v328 = vadd.f32 %v327, 1.1283791
        %v329 = vmul.f32 %v315, %v328
        %v330 = vmul.f32 %v318, 3.8918573e-05
        %v331 = vadd.f32 %v330, 0.001143296
        %v332 = vmul.f32 %v318, %v331
        %v333 = vadd.f32 %v332, 0.014752088
        %v334 = vmul.f32 %v318, %v333
        %v335 = vadd.f32 %v334, 0.112945676
        %v336 = vmul.f32 %v318, %v335
        %v337 = vadd.f32 %v336, 0.4994258
        %v338 = vmul.f32 %v318, %v337
        %v339 = vadd.f32 %v338, 1.0
        %v340 = vrcp.pop %v339
        %v341 = vmul.f32 %v339, %v340
        %v342 = vsub.f32 1.0, %v341
        %v343 = vmul.f32 %v340, %v342
        %v344 = vadd.f32 %v340, %v343
        %vm345 = vweird.f32 %v339
        %vm346 = vweird.f32 %v340
        %vm347 = vmor %vm345, %vm346
        %v348 = vsel %vm347, %v340, %v344
        %v349 = vand.u32 2147483647, %v339
        %vm350 = vcmp.eq.f32.partialorder %v349, 8.507059e+37
        %v351 = vand.u32 %v339, 2147483648
        %v352 = vor.u32 1.1754944e-38, %v351
        %v353 = vsel %vm350, %v352, %v348
        %v354 = vmul.f32 %v329, %v353
        %v355 = vmin.f32 %v354, 1.0
        %v356 = vmax.f32 %v355, -1.0
        %v357 = vmul.f32 %v316, %v316
        %v358 = vmin.f32 16.0, %v357
        %v359 = vmul.f32 %v358, 2.1237322e-06
        %v360 = vadd.f32 %v359, 0.00028619796
        %v361 = vmul.f32 %v358, %v360
        %v362 = vadd.f32 %v361, 0.0036580483
        %v363 = vmul.f32 %v358, %v362
        %v364 = vadd.f32 %v363, 0.05243302
        %v365 = vmul.f32 %v358, %v364
        %v366 = vadd.f32 %v365, 0.18741608
        %v367 = vmul.f32 %v358, %v366
        %v368 = vadd.f32 %v367, 1.1283791
        %v369 = vmul.f32 %v316, %v368
        %v370 = vmul.f32 %v358, 3.8918573e-05
        %v371 = vadd.f32 %v370, 0.001143296
        %v372 = vmul.f32 %v358, %v371
        %v373 = vadd.f32 %v372, 0.014752088
        %v374 = vmul.f32 %v358, %v373
        %v375 = vadd.f32 %v374, 0.112945676
        %v376 = vmul.f32 %v358, %v375
        %v377 = vadd.f32 %v376, 0.4994258
        %v378 = vmul.f32 %v358, %v377
        %v379 = vadd.f32 %v378, 1.0
        %v380 = vrcp.pop %v379
        %v381 = vmul.f32 %v379, %v380
        %v382 = vsub.f32 1.0, %v381
        %v383 = vmul.f32 %v380, %v382
        %v384 = vadd.f32 %v380, %v383
        %vm385 = vweird.f32 %v379
        %vm386 = vweird.f32 %v380
        %vm387 = vmor %vm385, %vm386
        %v388 = vsel %vm387, %v380, %v384
        %v389 = vand.u32 2147483647, %v379
        %vm390 = vcmp.eq.f32.partialorder %v389, 8.507059e+37
        %v391 = vand.u32 %v379, 2147483648
        %v392 = vor.u32 1.1754944e-38, %v391
        %v393 = vsel %vm390, %v392, %v388
        %v394 = vmul.f32 %v369, %v393
        %v395 = vmin.f32 %v394, 1.0
        %v396 = vmax.f32 %v395, -1.0
        %v397 = vadd.f32 %v356, 1.0
        %v398 = vadd.f32 %v396, 1.0
        %v399 = vmul.f32 %v313, %v397
        %v400 = vmul.f32 %v314, %v398
        %401 = vadd.xlane.f32.xlu0 %v399
        %v402 = vpop.xlane.xlu0 %401
        %403 = vadd.xlane.f32.xlu0 %v400
        %v404 = vpop.xlane.xlu0 %403
        %v405 = vmul.f32 %v402, 0.03125
        %v406 = vmul.f32 %v404, 0.03125
        %v407 = vsub.f32 %v399, %v405
        %v408 = vsub.f32 %v400, %v406
        %v409 = vmul.f32 %v407, %v407
        %v410 = vmul.f32 %v408, %v408
        %411 = vadd.xlane.f32.xlu0 %v409
        %v412 = vpop.xlane.xlu0 %411
        %413 = vadd.xlane.f32.xlu0 %v410
        %v414 = vpop.xlane.xlu0 %413
        %v415 = vmul.f32 %v405, %v405
        %v416 = vmul.f32 %v406, %v406
        %v417 = vmul.f32 %v415, 96.0
        %v418 = vmul.f32 %v416, 96.0
        %v419 = vsub.f32 %v412, %v417
        %v420 = vsub.f32 %v414, %v418
        %v421 = vmul.f32 %v419, 0.03125
        %v422 = vmul.f32 %v420, 0.03125
        %v423 = vadd.f32 %v421, 1e-06
        %v424 = vadd.f32 %v422, 1e-06
        %v425 = vrsqrt.pop %v423
        %v426 = vmul.f32 %v425, %v423
        %v427 = vmul.f32 %v426, %v425
        %v428 = vmul.f32 0.5, %v427
        %v429 = vsub.f32 1.5, %v428
        %v430 = vmul.f32 %v425, %v429
        %vm431 = vweird.f32 %v423
        %vm432 = vweird.f32 %v425
        %vm433 = vmor %vm431, %vm432
        %v434 = vsel %vm433, %v425, %v430
        %v435 = vrsqrt.pop %v424
        %v436 = vmul.f32 %v435, %v424
        %v437 = vmul.f32 %v436, %v435
        %v438 = vmul.f32 0.5, %v437
        %v439 = vsub.f32 1.5, %v438
        %v440 = vmul.f32 %v435, %v439
        %vm441 = vweird.f32 %v424
        %vm442 = vweird.f32 %v435
        %vm443 = vmor %vm441, %vm442
        %v444 = vsel %vm443, %v435, %v440
        %v445 = vmul.f32 %v407, %v434
        %v446 = vmul.f32 %v408, %v444
        %v447 = vld [vmem:[#allocation2] sm:$0xff]
        %v448 = vld [vmem:[#allocation2 + $0x8] sm:$0xff]
        %v449 = vld [vmem:[#allocation2 + $0x10] sm:$0xff]
        %v450 = vld [vmem:[#allocation2 + $0x18] sm:$0xff]
        %v451 = vld [vmem:[#allocation2 + $0x20] sm:$0xff]
        %v452 = vld [vmem:[#allocation2 + $0x28] sm:$0xff]
        %v453 = vld [vmem:[#allocation2 + $0x30] sm:$0xff]
        %v454 = vld [vmem:[#allocation2 + $0x38] sm:$0xff]
        %v455 = vld [vmem:[#allocation2 + $0x40] sm:$0xff]
        %v456 = vld [vmem:[#allocation2 + $0x48] sm:$0xff]
        %v457 = vld [vmem:[#allocation2 + $0x50] sm:$0xff]
        %v458 = vld [vmem:[#allocation2 + $0x58] sm:$0xff]
        %v459 = vld [vmem:[#allocation2 + $0x60] sm:$0xff]
        %v460 = vld [vmem:[#allocation2 + $0x68] sm:$0xff]
        %v461 = vld [vmem:[#allocation2 + $0x70] sm:$0xff]
        %v462 = vld [vmem:[#allocation2 + $0x78] sm:$0xff]
        %v463 = vld [vmem:[%s4] sm:$0x1]
        %v465 = vperm.slane %v463, 0
        %467 = vmatpush.msra.mxu0 %v462
        %468 = vmatpush.msra.mxu0 %v461
        %469 = vmatpush.msra.mxu0 %v460
        %470 = vmatpush.msra.mxu0 %v459
        %471 = vmatpush.msra.mxu0 %v458
        %472 = vmatpush.msra.mxu0 %v457
        %473 = vmatpush.msra.mxu0 %v456
        %474 = vmatpush.msra.mxu0 %v455
        %475 = vmatpush.msra.mxu0 %v454
        %476 = vmatpush.msra.mxu0 %v453
        %477 = vmatpush.msra.mxu0 %v452
        %478 = vmatpush.msra.mxu0 %v451
        %479 = vmatpush.msra.mxu0 %v450
        %480 = vmatpush.msra.mxu0 %v449
        %481 = vmatpush.msra.mxu0 %v448
        %482 = vmatpush.msra.mxu0 %v447
        %483 = vmatmul.f32.gmra.mxu0 %v445
        %v484 = vpop.f32.mrf.mxu0
        %v485 = vadd.f32 %v465, %v484
        %486 = vmatmul.f32.gmra.mxu0 %v446
        %v487 = vpop.f32.mrf.mxu0
        %v488 = vadd.f32 %v465, %v487
        %489 = vdwg.mxu0
        %490 = vst [vmem:[%s259] sm:$0xff] %v485
        %491 = vst [vmem:[%s259 + $0x8] sm:$0xff] %v488
        %s492 = sand.u32 %s154, 1
        %s493 = scalar_lea.sflag [#allocation4], %s492
        %s494 = sand.u32 %s154, 1
        %s495 = smul.addr %s494, 16
        %s496 = scalar_lea.vmem [#allocation5], %s495
        // Predicated region
        $region45: #{tpu_custom_call.1} parent=39 // pred_check
          %p497 = pneg %p164
        $region46: #{tpu_custom_call.1} parent=39 // pred_check_branch
          %499 = sbr.rel (%p497) target = $region48
        $region47: #{tpu_custom_call.1} parent=39 // pred_region
          %s500 = smul.u32 2, %s25
          %502 = vsyncadd %s493, 0
          %s503 = smul.addr %s24, 2
          %s504 = sadd.s32 %s500, %s503
          %s505 = smul.addr %s504, 8
          %s506 = scalar_lea.hbm %s5, %s505
          %s507 = sshll.u32 %s496, 4
          %s508 = int_to_ptr.vmem [resolvable:$true] %s507
          %s509 = sshll.u32 %s506, 4
          %s510 = int_to_ptr.hbm [resolvable:$true] %s509
          %515 = dma.vmem_to_hbm [thread:$0]  %s508, 256, %s510, %s493, 128, 128, 8
        $region48: #{tpu_custom_call.1} parent=39 // pred_fallthru
          _
      $region40: #{tpu_custom_call.1} parent=5 // pred_fallthru
        _
      %p516 = scmp.le.s32.totalorder 2, %s15
      // Predicated region
      $region49: #{tpu_custom_call.1} parent=5 // pred_check
        %p517 = pneg %p516
      $region50: #{tpu_custom_call.1} parent=5 // pred_check_branch
        %519 = sbr.rel (%p517) target = $region52
      $region51: #{tpu_custom_call.1} parent=5 // pred_region
        %s520 = ssub.s32 %s15, 2
        // Predicated region
        $region53: #{tpu_custom_call.1} parent=51 // pred_check
          %p521 = pneg %p170
        $region54: #{tpu_custom_call.1} parent=51 // pred_check_branch
          %523 = sbr.rel (%p521) target = $region56
        $region55: #{tpu_custom_call.1} parent=51 // pred_region
          %s524 = sand.u32 %s155, 1
          %s525 = scalar_lea.sflag [#allocation4], %s524
          %s526 = sand.u32 %s155, 1
          %s527 = smul.addr %s526, 16
          %s528 = scalar_lea.vmem [#allocation5], %s527
          %530 = dma.done %s525, 256
        $region56: #{tpu_custom_call.1} parent=51 // pred_fallthru
          _
      $region52: #{tpu_custom_call.1} parent=5 // pred_fallthru
        _
    $region6: #{tpu_custom_call.1} parent=1 // loop_footer
      %s19 = sadd.s32 1, %s15
    $region7: #{tpu_custom_call.1} parent=1 // loop_footer_branch
      %14 = sbr.rel target = $region3
    $region8: #{tpu_custom_call.1} parent=1 // loop_exit
      _
    %531 = vsyncpa [#allocation3], 1
    %s532 = scalar_lea.sflag [#allocation3], 1
    %533 = vsyncpa %s532, 1
    %534 = vsyncpa [#allocation4], 1
    %s535 = scalar_lea.sflag [#allocation4], 1
    %536 = vsyncpa %s535, 1

</llo_original>
